<compile_context>
chip_gen: v6e
topology: v6e:2x2x1
jax: 0.10.0
libtpu: 0.0.40
codegen_flags: <defaults>
</compile_context>

<pallas_src>
import functools

import jax
import jax.numpy as jnp
from jax.experimental import pallas as pl
from jax.experimental.pallas import tpu as pltpu

_LANES = 128      # vreg lane width
_SUBLANES = 8     # f32 sublanes per vreg


def _round_up(x, m):
    return (x + m - 1) // m * m


def _focal_loss_kernel(logits_ref, target_ref, loss_ref, *, gamma):
    """One batch tile: logits (T, C), targets (T, 1) -> loss rows (8, T)."""
    x = logits_ref[...].astype(jnp.float32)            # (T, C) f32 in-register
    t = target_ref[...]                                 # (T, 1) int32

    # "Gather" the target logit via a one-hot compare (no dynamic gather on TPU).
    cls = jax.lax.broadcasted_iota(jnp.int32, x.shape, 1)          # (T, C)
    logit_t = jnp.sum(jnp.where(cls == t, x, 0.0), axis=-1, keepdims=True)  # (T,1)

    # Numerically stable logsumexp; only x and ex are live (T, C) f32 temps.
    m = jnp.max(x, axis=-1, keepdims=True)               # (T, 1)
    ex = jnp.exp(x - m)                                   # (T, C)
    lse = m + jnp.log(jnp.sum(ex, axis=-1, keepdims=True))

    xent = lse - logit_t                                  # per-sample cross entropy
    p_t = jnp.exp(logit_t - lse)                          # softmax prob of target
    one_minus_p = 1.0 - p_t

    # Focal weight, specialized for the common static gammas.
    if gamma == 0.0:
        w = jnp.ones_like(one_minus_p)
    elif gamma == 1.0:
        w = one_minus_p
    elif gamma == 2.0:
        w = one_minus_p * one_minus_p
    else:
        # Guarded generic pow = exp(gamma*log(x)); avoids log(0) when p_t == 1.
        safe = jnp.maximum(one_minus_p, jnp.float32(1e-30))
        w = jnp.where(one_minus_p > 0.0,
                      jnp.exp(jnp.float32(gamma) * jnp.log(safe)),
                      jnp.zeros_like(one_minus_p))

    loss = w * xent                                       # (T, 1)

    # Lane-dense store: relayout the (T, 1) column into the batch-along-lanes
    # output block. Broadcasting to all 128 lanes first keeps the transpose
    # fully (8,128)-aligned (robust lowering, XLU has slack); after the
    # transpose every sublane row holds the full per-sample loss vector, so the
    # first 8 rows fill the (8, T) block and the wrapper reads sublane 0.
    t_rows = loss_ref.shape[0]                            # == 8
    loss_bc = jnp.broadcast_to(loss, (loss.shape[0], _LANES))       # (T, 128)
    loss_ref[...] = jnp.transpose(loss_bc, (1, 0))[:t_rows, :]      # (8, T)


def _choose_tile_rows(c, itemsize):
    """Batch-tile size from a VMEM byte budget, using lane-padded footprints."""
    c_pad = _round_up(c, _LANES)
    lane_row = _LANES * 4                      # bytes/row of a lane-padded f32 column
    row_bytes = (
        2 * c_pad * itemsize                   # double-buffered logits blocks
        + 2 * lane_row                         # double-buffered (T,1) target blocks
        + 3 * c_pad * 4                        # live (T, C) f32 temps (x, ex, select)
        + 6 * lane_row                         # (T,1)/(T,128) row temps + transpose
        + 2 * _SUBLANES * 4                    # double-buffered (8, T) output block
    )
    budget = 24 * 1024 * 1024                  # fits v7x's 64 MiB VMEM with headroom
    return max(_SUBLANES, budget // row_bytes), row_bytes


def focal_loss(logits, target, *, gamma=1.0, reduce=True, tile_rows=None):
    """logits: (N, C) float (f32 or bf16; bf16 preferred for HBM traffic),
    target: (N,) int of valid class ids. Returns scalar mean if reduce else (N,)."""
    n, c = logits.shape
    itemsize = jnp.dtype(logits.dtype).itemsize
    target2d = target.astype(jnp.int32).reshape(n, 1)

    auto_rows, row_bytes = _choose_tile_rows(c, itemsize)
    if tile_rows is None:
        tile_rows = auto_rows
        # Keep >= 2 grid steps when the batch allows it (v7x megacore sharding).
        if n >= 2 * _LANES:
            tile_rows = min(tile_rows, _round_up(pl.cdiv(n, 2), _LANES))
    tile_rows = int(tile_rows)
    # Never exceed the largest multiple-of-8 row count inside the batch, so only
    # the last block is ragged (no host-side padding needed).
    tile_rows = max(_SUBLANES,
                    min(tile_rows, max(_SUBLANES, (n // _SUBLANES) * _SUBLANES), 8192))
    if tile_rows >= _LANES:
        tile_rows = (tile_rows // _LANES) * _LANES   # lane-aligned -> unmasked stores
    else:
        tile_rows = _round_up(tile_rows, _SUBLANES)

    num_tiles = int(pl.cdiv(n, tile_rows))

    # VMEM limit from the actual (lane-padded) double-buffered blocks + temps.
    vmem_limit = int(min(40 * 1024 * 1024,
                         max(32 * 1024 * 1024, tile_rows * row_bytes + (8 << 20))))

    kernel = functools.partial(_focal_loss_kernel, gamma=float(gamma))

    out = pl.pallas_call(
        kernel,
        out_shape=jax.ShapeDtypeStruct((num_tiles * _SUBLANES, tile_rows), jnp.float32),
        grid_spec=pltpu.PrefetchScalarGridSpec(
            num_scalar_prefetch=0,
            grid=(num_tiles,),
            in_specs=[
                pl.BlockSpec((tile_rows, c), lambda i: (i, 0)),
                pl.BlockSpec((tile_rows, 1), lambda i: (i, 0)),
            ],
            # Lane-dense (8, tile_rows) output block; loss replicated over the 8
            # sublanes, wrapper reads sublane 0. Keeps the writeback one big
            # contiguous DMA instead of a 1-lane-wide masked store.
            out_specs=pl.BlockSpec((_SUBLANES, tile_rows), lambda i: (i, 0)),
        ),
        compiler_params=pltpu.CompilerParams(
            dimension_semantics=("parallel",),       # independent tiles -> megacore OK
            vmem_limit_bytes=vmem_limit,
        ),
    )(logits, target2d)

    loss = out.reshape(num_tiles, _SUBLANES, tile_rows)[:, 0, :].reshape(-1)[:n]
    return jnp.mean(loss) if reduce else loss


def _focal_loss_ref(logits, target, gamma=1.0, reduce=True):
    logits = logits.astype(jnp.float32)
    logp = jax.nn.log_softmax(logits, axis=1)
    n = logits.shape[0]
    logp_t = logp[jnp.arange(n), target]
    xent = -logp_t
    w = (1.0 - jnp.exp(logp_t)) ** gamma
    loss = w * xent
    return jnp.mean(loss) if reduce else loss


if __name__ == "__main__":
    key = jax.random.PRNGKey(0)
    k1, k2, k3, k4, k5, k6 = jax.random.split(key, 6)

    # --- case 1: small batch, single tile, module default gamma=1.0 ---
    N, C = 8, 32
    logits = jax.random.normal(k1, (N, C), dtype=jnp.float32)
    target = jax.random.randint(k2, (N,), 0, C, dtype=jnp.int32)
    out = jax.block_until_ready(focal_loss(logits, target, gamma=1.0, reduce=True))
    out_vec = jax.block_until_ready(focal_loss(logits, target, gamma=1.0, reduce=False))
    assert jnp.allclose(out, _focal_loss_ref(logits, target, 1.0, True), atol=1e-5, rtol=1e-5)
    assert jnp.allclose(out_vec, _focal_loss_ref(logits, target, 1.0, False), atol=1e-5, rtol=1e-5)

    # --- case 2: multi-tile grid with ragged last block (no host padding),
    #             gamma=2.0 specialization path ---
    N2, C2 = 20, 32
    logits2 = jax.random.normal(k3, (N2, C2), dtype=jnp.float32)
    target2 = jax.random.randint(k4, (N2,), 0, C2, dtype=jnp.int32)
    out2 = jax.block_until_ready(
        focal_loss(logits2, target2, gamma=2.0, reduce=True, tile_rows=8))
    out2_vec = jax.block_until_ready(
        focal_loss(logits2, target2, gamma=2.0, reduce=False, tile_rows=8))
    assert jnp.allclose(out2, _focal_loss_ref(logits2, target2, 2.0, True), atol=1e-5, rtol=1e-5)
    assert jnp.allclose(out2_vec, _focal_loss_ref(logits2, target2, 2.0, False), atol=1e-5, rtol=1e-5)

    # --- case 3: auto tile sizing, >=2 grid steps, generic-gamma path, C not a
    #             multiple of 128 ---
    N3, C3 = 300, 160
    logits3 = jax.random.normal(k5, (N3, C3), dtype=jnp.float32)
    target3 = jax.random.randint(k6, (N3,), 0, C3, dtype=jnp.int32)
    out3 = jax.block_until_ready(focal_loss(logits3, target3, gamma=1.5, reduce=False))
    assert out3.shape == (N3,)
    assert jnp.allclose(out3, _focal_loss_ref(logits3, target3, 1.5, False), atol=1e-5, rtol=1e-5)

    # --- case 4: bf16 logits over HBM (halved DMA), f32 in-register compute ---
    logits_bf16 = logits.astype(jnp.bfloat16)
    out_bf16 = jax.block_until_ready(focal_loss(logits_bf16, target, gamma=1.0, reduce=True))
    ref_bf16 = _focal_loss_ref(logits_bf16.astype(jnp.float32), target, 1.0, True)
    assert jnp.allclose(out_bf16, ref_bf16, atol=1e-4, rtol=1e-4)

    print("KERNEL_OK")
</pallas_src>

<mosaic_0001>
module attributes {stable_mosaic.version = 11 : i64} {
  func.func @_focal_loss_kernel(%arg0: i32, %arg1: memref<8x32xf32, #tpu.memory_space<vmem>>, %arg2: memref<8x1xi32, #tpu.memory_space<vmem>>, %arg3: memref<8x8xf32, #tpu.memory_space<vmem>>) attributes {dimension_semantics = [#tpu.dimension_semantics<parallel>], iteration_bounds = array<i64: 1>, scalar_prefetch = 0 : i64, scratch_operands = 0 : i64, tpu.core_type = #tpu.core_type<tc>, window_params = [{transform_indices = @transform_0, window_bounds = array<i64: 8, 32>}, {transform_indices = @transform_1, window_bounds = array<i64: 8, 1>}, {transform_indices = @transform_2, window_bounds = array<i64: 8, 8>}]} {
    %c0 = arith.constant 0 : index
    %c0_0 = arith.constant 0 : index
    %0 = vector.load %arg1[%c0, %c0_0] : memref<8x32xf32, #tpu.memory_space<vmem>>, vector<8x32xf32>
    %c0_1 = arith.constant 0 : index
    %c0_2 = arith.constant 0 : index
    %1 = vector.load %arg2[%c0_1, %c0_2] : memref<8x1xi32, #tpu.memory_space<vmem>>, vector<8x1xi32>
    %2 = tpu.iota {dimensions = array<i32: 1>} : vector<8x32xi32>
    %3 = vector.broadcast %1 : vector<8x1xi32> to vector<8x32xi32>
    %4 = arith.cmpi eq, %2, %3 : vector<8x32xi32>
    %cst = arith.constant 0.000000e+00 : f32
    %5 = vector.broadcast %cst : f32 to vector<8x32xf32>
    %6 = arith.select %4, %0, %5 : vector<8x32xi1>, vector<8x32xf32>
    %cst_3 = arith.constant dense<0.000000e+00> : vector<8xf32>
    %7 = vector.multi_reduction <add>, %6, %cst_3 [1] : vector<8x32xf32> to vector<8xf32>
    %8 = vector.shape_cast %7 : vector<8xf32> to vector<8x1xf32>
    %cst_4 = arith.constant dense<0xFF800000> : vector<8xf32>
    %9 = vector.multi_reduction <maximumf>, %0, %cst_4 [1] : vector<8x32xf32> to vector<8xf32>
    %10 = vector.shape_cast %9 : vector<8xf32> to vector<8x1xf32>
    %11 = vector.broadcast %10 : vector<8x1xf32> to vector<8x32xf32>
    %12 = arith.subf %0, %11 : vector<8x32xf32>
    %13 = math.exp %12 : vector<8x32xf32>
    %cst_5 = arith.constant dense<0.000000e+00> : vector<8xf32>
    %14 = vector.multi_reduction <add>, %13, %cst_5 [1] : vector<8x32xf32> to vector<8xf32>
    %15 = vector.shape_cast %14 : vector<8xf32> to vector<8x1xf32>
    %16 = math.log %15 : vector<8x1xf32>
    %17 = arith.addf %10, %16 : vector<8x1xf32>
    %18 = arith.subf %17, %8 : vector<8x1xf32>
    %19 = arith.subf %8, %17 : vector<8x1xf32>
    %20 = math.exp %19 : vector<8x1xf32>
    %cst_6 = arith.constant 1.000000e+00 : f32
    %21 = vector.broadcast %cst_6 : f32 to vector<8x1xf32>
    %22 = arith.subf %21, %20 : vector<8x1xf32>
    %23 = arith.mulf %22, %18 : vector<8x1xf32>
    %24 = vector.shape_cast %23 : vector<8x1xf32> to vector<8x1xf32>
    %25 = vector.broadcast %24 : vector<8x1xf32> to vector<8x128xf32>
    %26 = tpu.transpose %25, [1, 0] : vector<8x128xf32> -> vector<128x8xf32>
    %27 = vector.extract_strided_slice %26 {offsets = [0, 0], sizes = [8, 8], strides = [1, 1]} : vector<128x8xf32> to vector<8x8xf32>
    %c0_7 = arith.constant 0 : index
    %c0_8 = arith.constant 0 : index
    %28 = vector.load %arg3[%c0_7, %c0_8] : memref<8x8xf32, #tpu.memory_space<vmem>>, vector<8x8xf32>
    tpu.vector_store %arg3[%c0_7, %c0_8], %27 {strides = array<i32>} : memref<8x8xf32, #tpu.memory_space<vmem>>, vector<8x8xf32>,
    return
  }
  func.func @transform_0(%arg0: i32) -> (i32, i32) {
    %c0_i32 = arith.constant 0 : i32
    %c0_i32_0 = arith.constant 0 : i32
    return %arg0, %c0_i32 : i32, i32
  }
  func.func @transform_1(%arg0: i32) -> (i32, i32) {
    %c0_i32 = arith.constant 0 : i32
    %c0_i32_0 = arith.constant 0 : i32
    return %arg0, %c0_i32 : i32, i32
  }
  func.func @transform_2(%arg0: i32) -> (i32, i32) {
    %c0_i32 = arith.constant 0 : i32
    %c0_i32_0 = arith.constant 0 : i32
    return %arg0, %c0_i32 : i32, i32
  }
}

</mosaic_0001>

<llo_original>
// kernel: tpu_custom_call.1
$region0: #{tpu_custom_call.1}
  #allocation0 [shape = 'u32[]', space=smem, size = 0x4, offset = 0x4, fixed_abs, tag = 'smem constant byte address 0x4 - core index']
  #allocation1 [shape = 'u32[144,128]{1,0:T(1,128)}', space=vmem, size = 0x12000, scoped, tag = 'internal scratch']
  %s0 = inlined_call_operand.vmem [shape: f32[8,32], index: 0, kind: input, shape index: {}]
  %s1 = inlined_call_operand.vmem [shape: s32[8,1], index: 1, kind: input, shape index: {}]
  %s2 = inlined_call_operand.hbm [shape: f32[8,8], index: 2, kind: output, shape index: {}]
  %s3 = sld [smem:[#allocation0]]
  $region18: #{tpu_custom_call.1} parent=0
    _
  %s5 = ssub.s32 1, %s3
  %s6 = scalar_select 0, %s5, %s3
  $region1: #{tpu_custom_call.1} parent=0
    #allocation2 [shape = 'u8[4096]{0}', space=vmem, size = 0x1000, scoped, tag = 'output window, operand 0, single buffered']
    #allocation3 [shape = 's32[1]{0}', space=sflag, size = 0x4, scoped, tag = 'scoped memory for tpu_custom_call.1']
    %7 = vsyncpa [#allocation3], 0
    // Predicated region
    $region2: #{tpu_custom_call.1} parent=1 // pred_check
      _
    $region3: #{tpu_custom_call.1} parent=1 // pred_check_branch
      %9 = sbr.rel (0) target = $region5
    $region4: #{tpu_custom_call.1} parent=1 // pred_region
      _
    $region5: #{tpu_custom_call.1} parent=1 // pred_fallthru
      _
    // Predicated region
    $region6: #{tpu_custom_call.1} parent=1 // pred_check
      _
    $region7: #{tpu_custom_call.1} parent=1 // pred_check_branch
      %11 = sbr.rel (0) target = $region9
    $region8: #{tpu_custom_call.1} parent=1 // pred_region
      _
    $region9: #{tpu_custom_call.1} parent=1 // pred_fallthru
      _
    %v12 = vld [vmem:[%s0] sm:$0xff]
    %v13 = vld [vmem:[%s1] sm:$0xff]
    %v14 = vlaneseq
    %v15 = vand.u32 %v14, 127
    %16 = vset.pattern.permute.xlu0 0
    %17 = vperm.xlu0 %16, %v13
    %v18 = vpop.permute.xlu0 %17
    %vm19 = vcmp.eq.s32.totalorder %v15, %v18
    %v20 = vsel %vm19, %v12, 0.0
    %vm21 = vcmask 261120
    %v22 = vsel %vm21, %v20, 0.0
    %23 = vadd.xlane.f32.xlu0 %v22
    %v24 = vpop.xlane.xlu0 %23
    %v25 = vsel %vm21, %v12, -inf
    %26 = vmax.xlane.f32.xlu0 %v25
    %v27 = vpop.xlane.xlu0 %26
    %v28 = vsub.f32 %v12, %v27
    %v29 = vmul.f32 %v28, 1.442695
    %v30 = vpow.pop %v29
    %v31 = vsel %vm21, %v30, 0.0
    %32 = vadd.xlane.f32.xlu0 %v31
    %v33 = vpop.xlane.xlu0 %32
    %v34 = vlog2.pop %v33
    %v35 = vmul.f32 %v34, 0.6931472
    %v36 = vadd.f32 %v27, %v35
    %v37 = vsub.f32 %v36, %v24
    %v38 = vsub.f32 %v24, %v36
    %v39 = vmul.f32 %v38, 1.442695
    %v40 = vpow.pop %v39
    %v41 = vsub.f32 1.0, %v40
    %v42 = vmul.f32 %v41, %v37
    %43 = vxpose.xlu0.b32.start [1/16] %v42, 128
    %44 = vxpose.xlu0.b32.cont [2/16] 0.0, 128
    %45 = vxpose.xlu0.b32.cont [3/16] 0.0, 128
    %46 = vxpose.xlu0.b32.cont [4/16] 0.0, 128
    %47 = vxpose.xlu0.b32.cont [5/16] 0.0, 128
    %48 = vxpose.xlu0.b32.cont [6/16] 0.0, 128
    %49 = vxpose.xlu0.b32.cont [7/16] 0.0, 128
    %50 = vxpose.xlu0.b32.cont [8/16] 0.0, 128
    %51 = vxpose.xlu0.b32.cont [9/16] 0.0, 128
    %52 = vxpose.xlu0.b32.cont [10/16] 0.0, 128
    %53 = vxpose.xlu0.b32.cont [11/16] 0.0, 128
    %54 = vxpose.xlu0.b32.cont [12/16] 0.0, 128
    %55 = vxpose.xlu0.b32.cont [13/16] 0.0, 128
    %56 = vxpose.xlu0.b32.cont [14/16] 0.0, 128
    %57 = vxpose.xlu0.b32.cont [15/16] 0.0, 128
    %58 = vxpose.xlu0.b32.end [16/16] 0.0, 128
    %v59 = vpop.trf.xlu0
    %v60 = vpop.trf.xlu0
    %v61 = vpop.trf.xlu0
    %v62 = vpop.trf.xlu0
    %v63 = vpop.trf.xlu0
    %v64 = vpop.trf.xlu0
    %v65 = vpop.trf.xlu0
    %v66 = vpop.trf.xlu0
    %v67 = vpop.trf.xlu0
    %v68 = vpop.trf.xlu0
    %v69 = vpop.trf.xlu0
    %v70 = vpop.trf.xlu0
    %v71 = vpop.trf.xlu0
    %v72 = vpop.trf.xlu0
    %v73 = vpop.trf.xlu0
    %v74 = vpop.trf.xlu0
    %vm75 = vcmask 64512
    %76 = vst.msk [vmem:[#allocation2] sm:$0xff] %vm75, %v59
    // Predicated region
    $region10: #{tpu_custom_call.1} parent=1 // pred_check
      _
    $region11: #{tpu_custom_call.1} parent=1 // pred_check_branch
      %78 = sbr.rel (0) target = $region13
    $region12: #{tpu_custom_call.1} parent=1 // pred_region
      %s80 = ssub.s32 128, 128
      %81 = vsyncadd [#allocation3], %s80
      %s83 = sshll.u32 [#allocation2], 4
      %s84 = int_to_ptr.vmem [resolvable:$true] %s83
      %86 = dma.vmem_to_hbm [thread:$0]  %s84, 128, %s2, [#allocation3]
    $region13: #{tpu_custom_call.1} parent=1 // pred_fallthru
      _
    // Predicated region
    $region14: #{tpu_custom_call.1} parent=1 // pred_check
      _
    $region15: #{tpu_custom_call.1} parent=1 // pred_check_branch
      %88 = sbr.rel (0) target = $region17
    $region16: #{tpu_custom_call.1} parent=1 // pred_region
      %89 = dma.done [#allocation3], 128
    $region17: #{tpu_custom_call.1} parent=1 // pred_fallthru
      _
    %90 = vsyncpa [#allocation3], 1

</llo_original>
